<compile_context>
chip_gen: v7x
topology: tpu7x:2x2x1
jax: 0.10.0
libtpu: 0.0.40
codegen_flags: <defaults>
</compile_context>

<pallas_src>
import functools

import jax
import jax.numpy as jnp
from jax.experimental import pallas as pl
from jax.experimental.pallas import tpu as pltpu


def _round_up(n, m):
    return ((n + m - 1) // m) * m


def _mlp_kernel(x_ref, s1_ref, s2_ref, mean_ref, *, in_p, hid):
    # x_ref: (TB, in_p) bf16
    # s1_ref: (in_p + 8 + hid + 8, hid) bf16  -> [w1 | b1(pad8) | w2 | b2(pad8)]
    # s2_ref: (hid + 8, out) bf16            -> [w3 | b3(pad8)]
    x = x_ref[...]

    w1 = s1_ref[0:in_p, :]
    b1 = s1_ref[in_p:in_p + 1, :].astype(jnp.float32)
    w2 = s1_ref[in_p + 8:in_p + 8 + hid, :]
    b2 = s1_ref[in_p + 8 + hid:in_p + 8 + hid + 1, :].astype(jnp.float32)
    w3 = s2_ref[0:hid, :]
    b3 = s2_ref[hid:hid + 1, :].astype(jnp.float32)

    h1 = jnp.dot(x, w1, preferred_element_type=jnp.float32) + b1
    h1 = jnp.maximum(h1, 0.0)
    h2 = jnp.dot(h1.astype(jnp.bfloat16), w2, preferred_element_type=jnp.float32) + b2
    h2 = jnp.maximum(h2, 0.0)
    mean_ref[...] = (
        jnp.dot(h2.astype(jnp.bfloat16), w3, preferred_element_type=jnp.float32) + b3
    )


def basic_distribution_network_forward(x, params, *, block_b=256):
    """x: (B, input_size) float32. Returns (mean, action_log_std, exp(action_log_std))."""
    w1, b1, w2, b2, w3, b3, log_std = (
        params["w1"], params["b1"], params["w2"], params["b2"],
        params["w3"], params["b3"], params["log_std"])

    input_size, hid = w1.shape
    out_size = w3.shape[1]
    B = x.shape[0]

    in_p = _round_up(input_size, 8)

    def pad_rows(a, rows):
        return jnp.pad(a, ((0, rows - a.shape[0]), (0, 0)))

    # Pack weights/biases into two bf16 slabs with 8-row-aligned segments.
    slab1 = jnp.concatenate([
        pad_rows(w1, in_p),
        pad_rows(b1.reshape(1, hid), 8),
        w2,
        pad_rows(b2.reshape(1, hid), 8),
    ], axis=0).astype(jnp.bfloat16)
    slab2 = jnp.concatenate([
        w3,
        pad_rows(b3.reshape(1, out_size), 8),
    ], axis=0).astype(jnp.bfloat16)

    # Batch tiling: TB rows per grid step (multiple of 8 sublanes).
    tb = _round_up(min(block_b, _round_up(B, 8)), 8)
    b_pad = _round_up(B, tb)
    x_p = jnp.pad(x, ((0, b_pad - B), (0, in_p - input_size))).astype(jnp.bfloat16)

    kernel = functools.partial(_mlp_kernel, in_p=in_p, hid=hid)

    mean = pl.pallas_call(
        kernel,
        out_shape=jax.ShapeDtypeStruct((b_pad, out_size), jnp.float32),
        grid=(b_pad // tb,),
        in_specs=[
            pl.BlockSpec((tb, in_p), lambda i: (i, 0)),
            pl.BlockSpec(slab1.shape, lambda i: (0, 0)),  # resident across steps
            pl.BlockSpec(slab2.shape, lambda i: (0, 0)),
        ],
        out_specs=pl.BlockSpec((tb, out_size), lambda i: (i, 0)),
        compiler_params=pltpu.CompilerParams(
            dimension_semantics=("parallel",)),
    )(x_p, slab1, slab2)

    mean = mean[:B]
    # Batch-independent outputs: hoisted out of the kernel (pure XLA, no DMA overhead).
    return mean, log_std, jnp.exp(log_std)


def _xavier_uniform(key, fan_in, fan_out):
    # Matches torch.nn.init.xavier_uniform_ (gain=1): U(-a, a), a = sqrt(6/(fan_in+fan_out)).
    # Stored pre-transposed to (in, out) so y = x @ W.
    bound = (6.0 / (fan_in + fan_out)) ** 0.5
    return jax.random.uniform(key, (fan_in, fan_out), jnp.float32,
                              minval=-bound, maxval=bound)


def init_params(key, input_size, output_size):
    k1, k2, k3 = jax.random.split(key, 3)
    return {
        "w1": _xavier_uniform(k1, input_size, 64),
        "b1": jnp.zeros((1, 64), jnp.float32),
        "w2": _xavier_uniform(k2, 64, 64),
        "b2": jnp.zeros((1, 64), jnp.float32),
        "w3": _xavier_uniform(k3, 64, output_size),
        "b3": jnp.zeros((1, output_size), jnp.float32),
        "log_std": jnp.zeros((1, output_size), jnp.float32),
    }


def _reference_forward(x, p):
    h1 = jnp.maximum(x @ p["w1"] + p["b1"], 0.0)
    h2 = jnp.maximum(h1 @ p["w2"] + p["b2"], 0.0)
    mean = h2 @ p["w3"] + p["b3"]
    return mean, p["log_std"], jnp.exp(p["log_std"])


if __name__ == "__main__":
    key = jax.random.PRNGKey(0)
    k_param, k_x1, k_x2 = jax.random.split(key, 3)

    batch, input_size, output_size = 8, 32, 8
    params = init_params(k_param, input_size, output_size)

    # Small single-block case.
    x = jax.random.normal(k_x1, (batch, input_size), jnp.float32)
    mean, log_std, std = basic_distribution_network_forward(x, params)
    jax.block_until_ready((mean, log_std, std))

    ref_mean, ref_log_std, ref_std = _reference_forward(x, params)
    # bf16 matmul inputs (f32 accumulation) -> loosen tolerance vs. the f32 reference.
    assert mean.shape == ref_mean.shape
    assert jnp.allclose(mean, ref_mean, atol=2e-2, rtol=2e-2)
    assert jnp.allclose(log_std, ref_log_std)
    assert jnp.allclose(std, ref_std)

    # Multi-step grid + batch-padding path (B not a multiple of the tile).
    x2 = jax.random.normal(k_x2, (100, input_size), jnp.float32)
    mean2, _, _ = basic_distribution_network_forward(x2, params, block_b=32)
    jax.block_until_ready(mean2)
    ref_mean2, _, _ = _reference_forward(x2, params)
    assert mean2.shape == ref_mean2.shape
    assert jnp.allclose(mean2, ref_mean2, atol=2e-2, rtol=2e-2)

    print("KERNEL_OK")
</pallas_src>

<mosaic_0001>
module attributes {stable_mosaic.version = 11 : i64} {
  func.func @_mlp_kernel(%arg0: i32, %arg1: memref<8x32xbf16, #tpu.memory_space<vmem>>, %arg2: memref<112x64xbf16, #tpu.memory_space<vmem>>, %arg3: memref<72x8xbf16, #tpu.memory_space<vmem>>, %arg4: memref<8x8xf32, #tpu.memory_space<vmem>>) attributes {dimension_semantics = [#tpu.dimension_semantics<parallel>], iteration_bounds = array<i64: 1>, scalar_prefetch = 0 : i64, scratch_operands = 0 : i64, tpu.core_type = #tpu.core_type<tc>, window_params = [{transform_indices = @transform_0, window_bounds = array<i64: 8, 32>}, {pipeline_mode = #tpu.pipeline_mode<synchronous>, transform_indices = @transform_1, window_bounds = array<i64: 112, 64>}, {pipeline_mode = #tpu.pipeline_mode<synchronous>, transform_indices = @transform_2, window_bounds = array<i64: 72, 8>}, {transform_indices = @transform_3, window_bounds = array<i64: 8, 8>}]} {
    %c0 = arith.constant 0 : index
    %c0_0 = arith.constant 0 : index
    %0 = vector.load %arg1[%c0, %c0_0] : memref<8x32xbf16, #tpu.memory_space<vmem>>, vector<8x32xbf16>
    %c0_1 = arith.constant 0 : index
    %c0_2 = arith.constant 0 : index
    %1 = vector.load %arg2[%c0_1, %c0_2] : memref<112x64xbf16, #tpu.memory_space<vmem>>, vector<32x64xbf16>
    %c32 = arith.constant 32 : index
    %c0_3 = arith.constant 0 : index
    %2 = vector.load %arg2[%c32, %c0_3] : memref<112x64xbf16, #tpu.memory_space<vmem>>, vector<1x64xbf16>
    %3 = arith.extf %2 : vector<1x64xbf16> to vector<1x64xf32>
    %c40 = arith.constant 40 : index
    %c0_4 = arith.constant 0 : index
    %4 = vector.load %arg2[%c40, %c0_4] : memref<112x64xbf16, #tpu.memory_space<vmem>>, vector<64x64xbf16>
    %c104 = arith.constant 104 : index
    %c0_5 = arith.constant 0 : index
    %5 = vector.load %arg2[%c104, %c0_5] : memref<112x64xbf16, #tpu.memory_space<vmem>>, vector<1x64xbf16>
    %6 = arith.extf %5 : vector<1x64xbf16> to vector<1x64xf32>
    %c0_6 = arith.constant 0 : index
    %c0_7 = arith.constant 0 : index
    %7 = vector.load %arg3[%c0_6, %c0_7] : memref<72x8xbf16, #tpu.memory_space<vmem>>, vector<64x8xbf16>
    %c64 = arith.constant 64 : index
    %c0_8 = arith.constant 0 : index
    %8 = vector.load %arg3[%c64, %c0_8] : memref<72x8xbf16, #tpu.memory_space<vmem>>, vector<1x8xbf16>
    %9 = arith.extf %8 : vector<1x8xbf16> to vector<1x8xf32>
    %cst = arith.constant dense<0.000000e+00> : vector<8x64xf32>
    %10 = tpu.matmul %0, %1, %cst {dimension_numbers = #tpu.dot_dimension_numbers<[1], [0], [0], [1], [0, 0, 1, 1], [], []>} : vector<8x32xbf16>, vector<32x64xbf16>, vector<8x64xf32> -> vector<8x64xf32>
    %11 = vector.broadcast %3 : vector<1x64xf32> to vector<8x64xf32>
    %12 = arith.addf %10, %11 : vector<8x64xf32>
    %cst_9 = arith.constant 0.000000e+00 : f32
    %13 = vector.broadcast %cst_9 : f32 to vector<8x64xf32>
    %14 = arith.maximumf %12, %13 : vector<8x64xf32>
    %15 = arith.truncf %14 : vector<8x64xf32> to vector<8x64xbf16>
    %cst_10 = arith.constant dense<0.000000e+00> : vector<8x64xf32>
    %16 = tpu.matmul %15, %4, %cst_10 {dimension_numbers = #tpu.dot_dimension_numbers<[1], [0], [0], [1], [0, 0, 1, 1], [], []>} : vector<8x64xbf16>, vector<64x64xbf16>, vector<8x64xf32> -> vector<8x64xf32>
    %17 = vector.broadcast %6 : vector<1x64xf32> to vector<8x64xf32>
    %18 = arith.addf %16, %17 : vector<8x64xf32>
    %cst_11 = arith.constant 0.000000e+00 : f32
    %19 = vector.broadcast %cst_11 : f32 to vector<8x64xf32>
    %20 = arith.maximumf %18, %19 : vector<8x64xf32>
    %21 = arith.truncf %20 : vector<8x64xf32> to vector<8x64xbf16>
    %cst_12 = arith.constant dense<0.000000e+00> : vector<8x8xf32>
    %22 = tpu.matmul %21, %7, %cst_12 {dimension_numbers = #tpu.dot_dimension_numbers<[1], [0], [0], [1], [0, 0, 1, 1], [], []>} : vector<8x64xbf16>, vector<64x8xbf16>, vector<8x8xf32> -> vector<8x8xf32>
    %23 = vector.broadcast %9 : vector<1x8xf32> to vector<8x8xf32>
    %24 = arith.addf %22, %23 : vector<8x8xf32>
    %c0_13 = arith.constant 0 : index
    %c0_14 = arith.constant 0 : index
    %25 = vector.load %arg4[%c0_13, %c0_14] : memref<8x8xf32, #tpu.memory_space<vmem>>, vector<8x8xf32>
    tpu.vector_store %arg4[%c0_13, %c0_14], %24 {strides = array<i32>} : memref<8x8xf32, #tpu.memory_space<vmem>>, vector<8x8xf32>,
    return
  }
  func.func @transform_0(%arg0: i32) -> (i32, i32) {
    %c0_i32 = arith.constant 0 : i32
    %c0_i32_0 = arith.constant 0 : i32
    return %arg0, %c0_i32 : i32, i32
  }
  func.func @transform_1(%arg0: i32) -> (i32, i32) {
    %c0_i32 = arith.constant 0 : i32
    %c0_i32_0 = arith.constant 0 : i32
    %c0_i32_1 = arith.constant 0 : i32
    return %c0_i32, %c0_i32_0 : i32, i32
  }
  func.func @transform_2(%arg0: i32) -> (i32, i32) {
    %c0_i32 = arith.constant 0 : i32
    %c0_i32_0 = arith.constant 0 : i32
    %c0_i32_1 = arith.constant 0 : i32
    return %c0_i32, %c0_i32_0 : i32, i32
  }
  func.func @transform_3(%arg0: i32) -> (i32, i32) {
    %c0_i32 = arith.constant 0 : i32
    %c0_i32_0 = arith.constant 0 : i32
    return %arg0, %c0_i32 : i32, i32
  }
}

</mosaic_0001>

<llo_original>
// kernel: tpu_custom_call.1
$region0: #{tpu_custom_call.1}
  #allocation0 [shape = 'u32[]', space=smem, size = 0x4, offset = 0x4, fixed_abs, tag = 'smem constant byte address 0x4 - core index']
  #allocation1 [shape = 'u32[144,128]{1,0:T(1,128)}', space=vmem, size = 0x12000, scoped, tag = 'internal scratch']
  %s0 = inlined_call_operand.vmem [shape: bf16[8,32], index: 0, kind: input, shape index: {}]
  %s1 = inlined_call_operand.vmem [shape: bf16[112,64], index: 1, kind: input, shape index: {}]
  %s2 = inlined_call_operand.vmem [shape: bf16[72,8], index: 2, kind: input, shape index: {}]
  %s3 = inlined_call_operand.hbm [shape: f32[8,8], index: 3, kind: output, shape index: {}]
  %s4 = sld [smem:[#allocation0]]
  $region22: #{tpu_custom_call.1} parent=0
    _
  %s6 = ssub.s32 1, %s4
  %s7 = scalar_select 0, %s6, %s4
  $region1: #{tpu_custom_call.1} parent=0
    #allocation2 [shape = 'u8[4096]{0}', space=vmem, size = 0x1000, scoped, tag = 'output window, operand 0, single buffered']
    #allocation3 [shape = 's32[1]{0}', space=sflag, size = 0x4, scoped, tag = 'scoped memory for tpu_custom_call.1']
    %8 = vsyncpa [#allocation3], 0
    // Predicated region
    $region2: #{tpu_custom_call.1} parent=1 // pred_check
      _
    $region3: #{tpu_custom_call.1} parent=1 // pred_check_branch
      %10 = sbr.rel (0) target = $region5
    $region4: #{tpu_custom_call.1} parent=1 // pred_region
      _
    $region5: #{tpu_custom_call.1} parent=1 // pred_fallthru
      _
    // Predicated region
    $region6: #{tpu_custom_call.1} parent=1 // pred_check
      _
    $region7: #{tpu_custom_call.1} parent=1 // pred_check_branch
      %12 = sbr.rel (0) target = $region9
    $region8: #{tpu_custom_call.1} parent=1 // pred_region
      _
    $region9: #{tpu_custom_call.1} parent=1 // pred_fallthru
      _
    // Predicated region
    $region10: #{tpu_custom_call.1} parent=1 // pred_check
      _
    $region11: #{tpu_custom_call.1} parent=1 // pred_check_branch
      %14 = sbr.rel (0) target = $region13
    $region12: #{tpu_custom_call.1} parent=1 // pred_region
      _
    $region13: #{tpu_custom_call.1} parent=1 // pred_fallthru
      _
    %v16 = vld [vmem:[%s0] sm:$0xf]
    %v17 = vld [vmem:[%s1] sm:$0xf]
    %v18 = vld [vmem:[%s1 + $0x4] sm:$0xf]
    %v19 = vld [vmem:[%s1 + $0x8] sm:$0xf]
    %v20 = vld [vmem:[%s1 + $0xc] sm:$0xf]
    %v21 = vld [vmem:[%s1 + $0x10] sm:$0x1]
    %v22 = vunpack.c.l.bf16 %v21
    %v23 = vld [vmem:[%s1 + $0x14] sm:$0xf]
    %v24 = vld [vmem:[%s1 + $0x18] sm:$0xf]
    %v25 = vld [vmem:[%s1 + $0x1c] sm:$0xf]
    %v26 = vld [vmem:[%s1 + $0x20] sm:$0xf]
    %v27 = vld [vmem:[%s1 + $0x24] sm:$0xf]
    %v28 = vld [vmem:[%s1 + $0x28] sm:$0xf]
    %v29 = vld [vmem:[%s1 + $0x2c] sm:$0xf]
    %v30 = vld [vmem:[%s1 + $0x30] sm:$0xf]
    %v31 = vld [vmem:[%s1 + $0x34] sm:$0x1]
    %v32 = vunpack.c.l.bf16 %v31
    %v33 = vld [vmem:[%s2] sm:$0xf]
    %v34 = vld [vmem:[%s2 + $0x4] sm:$0xf]
    %v35 = vld [vmem:[%s2 + $0x8] sm:$0xf]
    %v36 = vld [vmem:[%s2 + $0xc] sm:$0xf]
    %v37 = vld [vmem:[%s2 + $0x10] sm:$0xf]
    %v38 = vld [vmem:[%s2 + $0x14] sm:$0xf]
    %v39 = vld [vmem:[%s2 + $0x18] sm:$0xf]
    %v40 = vld [vmem:[%s2 + $0x1c] sm:$0xf]
    %v41 = vld [vmem:[%s2 + $0x20] sm:$0x1]
    %v42 = vunpack.c.l.bf16 %v41
    %v43 = vlaneseq
    %v44 = vshrl.u32 %v43, 7
    %v45 = vsub.s32 0, %v44
    %v46 = vrot.slane %v22, %v45
    %v51 = vunpack.c.l.b16 %v17
    %v52 = vunpack.c.l.b16 %v18
    %v53 = vunpack.c.l.b16 %v19
    %v54 = vunpack.c.l.b16 %v20
    %v55 = vpack.c.b16 %v52, %v51
    %v56 = vpack.c.b16 %v54, %v53
    %vm59 = vcmask 261120
    %v61 = vsel %vm59, %v16, 0
    %63 = vmatprep.subr.bf16.mxu0 0
    %64 = vmatpush1.bf16.msra.mxu0 %v55
    %65 = vmatprep.subr.bf16.mxu0 0
    %66 = vmatpush1.bf16.msra.mxu0 %v56
    %67 = vmatprep.subr.bf16.mxu0 0
    %68 = vmatpush1.bf16.msra.mxu0 0
    %69 = vmatprep.subr.bf16.mxu0 0
    %70 = vmatpush1.bf16.msra.mxu0 0
    %71 = vmatprep.subr.bf16.mxu0 0
    %72 = vmatpush1.bf16.msra.mxu0 0
    %73 = vmatprep.subr.bf16.mxu0 0
    %74 = vmatpush1.bf16.msra.mxu0 0
    %75 = vmatprep.subr.bf16.mxu0 0
    %76 = vmatpush1.bf16.msra.mxu0 0
    %77 = vmatprep.subr.bf16.mxu0 0
    %78 = vmatpush1.bf16.msra.mxu0 0
    %79 = vmatprep.subr.bf16.mxu0 0
    %80 = vmatpush1.bf16.msra.mxu0 0
    %81 = vmatprep.subr.bf16.mxu0 0
    %82 = vmatpush1.bf16.msra.mxu0 0
    %83 = vmatprep.subr.bf16.mxu0 0
    %84 = vmatpush1.bf16.msra.mxu0 0
    %85 = vmatprep.subr.bf16.mxu0 0
    %86 = vmatpush1.bf16.msra.mxu0 0
    %87 = vmatprep.subr.bf16.mxu0 0
    %88 = vmatpush1.bf16.msra.mxu0 0
    %89 = vmatprep.subr.bf16.mxu0 0
    %90 = vmatpush1.bf16.msra.mxu0 0
    %91 = vmatprep.subr.bf16.mxu0 0
    %92 = vmatpush1.bf16.msra.mxu0 0
    %93 = vmatprep.subr.bf16.mxu0 0
    %94 = vmatpush1.bf16.msra.mxu0 0
    %95 = vmatprep.mubr.bf16.mxu0 0
    %96 = vmatmul.mubr.bf16.gmra.mrb[0].mxu0 %v61
    %v97 = vpop.f32.mrb[0].mxu0
    %v98 = vadd.f32 %v46, %v97
    %v99 = vpop.f32.mrb[0].mxu0
    %v100 = vpop.f32.mrb[0].mxu0
    %v101 = vpop.f32.mrb[0].mxu0
    %102 = vdwg.mxu0
    %v103 = vmax.f32 %v98, 0.0
    %v104 = vpack.c.bf16 %v103, %v103
    %v105 = vlaneseq
    %v106 = vshrl.u32 %v105, 7
    %v107 = vsub.s32 0, %v106
    %v108 = vrot.slane %v32, %v107
    %v117 = vunpack.c.l.b16 %v23
    %v118 = vunpack.c.l.b16 %v24
    %v119 = vunpack.c.l.b16 %v25
    %v120 = vunpack.c.l.b16 %v26
    %v121 = vunpack.c.l.b16 %v27
    %v122 = vunpack.c.l.b16 %v28
    %v123 = vunpack.c.l.b16 %v29
    %v124 = vunpack.c.l.b16 %v30
    %v125 = vpack.c.b16 %v118, %v117
    %v126 = vpack.c.b16 %v120, %v119
    %v127 = vpack.c.b16 %v122, %v121
    %v128 = vpack.c.b16 %v124, %v123
    %vm133 = vcmask 523264
    %v135 = vsel %vm133, %v104, 0
    %137 = vmatprep.subr.bf16.mxu0 0
    %138 = vmatpush1.bf16.msra.mxu0 %v125
    %139 = vmatprep.subr.bf16.mxu0 0
    %140 = vmatpush1.bf16.msra.mxu0 %v126
    %141 = vmatprep.subr.bf16.mxu0 0
    %142 = vmatpush1.bf16.msra.mxu0 %v127
    %143 = vmatprep.subr.bf16.mxu0 0
    %144 = vmatpush1.bf16.msra.mxu0 %v128
    %145 = vmatprep.subr.bf16.mxu0 0
    %146 = vmatpush1.bf16.msra.mxu0 0
    %147 = vmatprep.subr.bf16.mxu0 0
    %148 = vmatpush1.bf16.msra.mxu0 0
    %149 = vmatprep.subr.bf16.mxu0 0
    %150 = vmatpush1.bf16.msra.mxu0 0
    %151 = vmatprep.subr.bf16.mxu0 0
    %152 = vmatpush1.bf16.msra.mxu0 0
    %153 = vmatprep.subr.bf16.mxu0 0
    %154 = vmatpush1.bf16.msra.mxu0 0
    %155 = vmatprep.subr.bf16.mxu0 0
    %156 = vmatpush1.bf16.msra.mxu0 0
    %157 = vmatprep.subr.bf16.mxu0 0
    %158 = vmatpush1.bf16.msra.mxu0 0
    %159 = vmatprep.subr.bf16.mxu0 0
    %160 = vmatpush1.bf16.msra.mxu0 0
    %161 = vmatprep.subr.bf16.mxu0 0
    %162 = vmatpush1.bf16.msra.mxu0 0
    %163 = vmatprep.subr.bf16.mxu0 0
    %164 = vmatpush1.bf16.msra.mxu0 0
    %165 = vmatprep.subr.bf16.mxu0 0
    %166 = vmatpush1.bf16.msra.mxu0 0
    %167 = vmatprep.subr.bf16.mxu0 0
    %168 = vmatpush1.bf16.msra.mxu0 0
    %169 = vmatprep.mubr.bf16.mxu0 0
    %170 = vmatmul.mubr.bf16.gmra.mrb[0].mxu0 %v135
    %v171 = vpop.f32.mrb[0].mxu0
    %v172 = vadd.f32 %v108, %v171
    %v173 = vpop.f32.mrb[0].mxu0
    %v174 = vpop.f32.mrb[0].mxu0
    %v175 = vpop.f32.mrb[0].mxu0
    %176 = vdwg.mxu0
    %v177 = vmax.f32 %v172, 0.0
    %v178 = vpack.c.bf16 %v177, %v177
    %v179 = vlaneseq
    %v180 = vshrl.u32 %v179, 7
    %v181 = vsub.s32 0, %v180
    %v182 = vrot.slane %v42, %v181
    %v191 = vunpack.c.l.b16 %v33
    %v192 = vunpack.c.l.b16 %v34
    %v193 = vunpack.c.l.b16 %v35
    %v194 = vunpack.c.l.b16 %v36
    %v195 = vunpack.c.l.b16 %v37
    %v196 = vunpack.c.l.b16 %v38
    %v197 = vunpack.c.l.b16 %v39
    %v198 = vunpack.c.l.b16 %v40
    %v199 = vpack.c.b16 %v192, %v191
    %v200 = vpack.c.b16 %v194, %v193
    %v201 = vpack.c.b16 %v196, %v195
    %v202 = vpack.c.b16 %v198, %v197
    %v208 = vsel %vm133, %v178, 0
    %210 = vmatprep.subr.bf16.mxu0 0
    %211 = vmatpush1.bf16.msra.mxu0 %v199
    %212 = vmatprep.subr.bf16.mxu0 0
    %213 = vmatpush1.bf16.msra.mxu0 %v200
    %214 = vmatprep.subr.bf16.mxu0 0
    %215 = vmatpush1.bf16.msra.mxu0 %v201
    %216 = vmatprep.subr.bf16.mxu0 0
    %217 = vmatpush1.bf16.msra.mxu0 %v202
    %218 = vmatprep.subr.bf16.mxu0 0
    %219 = vmatpush1.bf16.msra.mxu0 0
    %220 = vmatprep.subr.bf16.mxu0 0
    %221 = vmatpush1.bf16.msra.mxu0 0
    %222 = vmatprep.subr.bf16.mxu0 0
    %223 = vmatpush1.bf16.msra.mxu0 0
    %224 = vmatprep.subr.bf16.mxu0 0
    %225 = vmatpush1.bf16.msra.mxu0 0
    %226 = vmatprep.subr.bf16.mxu0 0
    %227 = vmatpush1.bf16.msra.mxu0 0
    %228 = vmatprep.subr.bf16.mxu0 0
    %229 = vmatpush1.bf16.msra.mxu0 0
    %230 = vmatprep.subr.bf16.mxu0 0
    %231 = vmatpush1.bf16.msra.mxu0 0
    %232 = vmatprep.subr.bf16.mxu0 0
    %233 = vmatpush1.bf16.msra.mxu0 0
    %234 = vmatprep.subr.bf16.mxu0 0
    %235 = vmatpush1.bf16.msra.mxu0 0
    %236 = vmatprep.subr.bf16.mxu0 0
    %237 = vmatpush1.bf16.msra.mxu0 0
    %238 = vmatprep.subr.bf16.mxu0 0
    %239 = vmatpush1.bf16.msra.mxu0 0
    %240 = vmatprep.subr.bf16.mxu0 0
    %241 = vmatpush1.bf16.msra.mxu0 0
    %242 = vmatprep.mubr.bf16.mxu0 0
    %243 = vmatmul.mubr.bf16.gmra.mrb[0].mxu0 %v208
    %v244 = vpop.f32.mrb[0].mxu0
    %v245 = vadd.f32 %v182, %v244
    %v246 = vpop.f32.mrb[0].mxu0
    %v247 = vpop.f32.mrb[0].mxu0
    %v248 = vpop.f32.mrb[0].mxu0
    %249 = vdwg.mxu0
    %vm250 = vcmask 64512
    %251 = vst.msk [vmem:[#allocation2] sm:$0xff] %vm250, %v245
    // Predicated region
    $region14: #{tpu_custom_call.1} parent=1 // pred_check
      _
    $region15: #{tpu_custom_call.1} parent=1 // pred_check_branch
      %253 = sbr.rel (0) target = $region17
    $region16: #{tpu_custom_call.1} parent=1 // pred_region
      %s255 = ssub.s32 128, 128
      %256 = vsyncadd [#allocation3], %s255
      %s258 = sshll.u32 [#allocation2], 4
      %s259 = int_to_ptr.vmem [resolvable:$true] %s258
      %261 = dma.vmem_to_hbm [thread:$0]  %s259, 128, %s3, [#allocation3]
    $region17: #{tpu_custom_call.1} parent=1 // pred_fallthru
      _
    // Predicated region
    $region18: #{tpu_custom_call.1} parent=1 // pred_check
      _
    $region19: #{tpu_custom_call.1} parent=1 // pred_check_branch
      %263 = sbr.rel (0) target = $region21
    $region20: #{tpu_custom_call.1} parent=1 // pred_region
      %264 = dma.done [#allocation3], 128
    $region21: #{tpu_custom_call.1} parent=1 // pred_fallthru
      _
    %265 = vsyncpa [#allocation3], 1

</llo_original>
